<compile_context>
chip_gen: v6e
topology: v6e:2x2x1
jax: 0.10.0
libtpu: 0.0.40
codegen_flags: <defaults>
</compile_context>

<pallas_src>
import functools

import jax
import jax.numpy as jnp
from jax.experimental import pallas as pl
from jax.experimental.pallas import tpu as pltpu


def _ce_kernel(logits_ref, labels_ref, num_ref, den_ref, *,
               num_classes, ignore_label, hw, tile, tiles_per_split, ragged):
    o = pl.program_id(1)    # pixel super-chunk ("parallel", megacore split)
    jj = pl.program_id(2)   # pixel tile within the super-chunk ("arbitrary")

    @pl.when(jj == 0)
    def _():
        num_ref[...] = jnp.zeros_like(num_ref)
        den_ref[...] = jnp.zeros_like(den_ref)

    logits = logits_ref[0].astype(jnp.float32)      # (C, T): pixels on lanes
    labels = labels_ref[0]                          # (1, T) int32

    valid = labels != ignore_label                  # (1, T) bool
    if ragged:
        # Mask the ragged tail / fully-OOB super-chunk tiles (hw, tile and
        # tiles_per_split are static Python ints closed over).
        lane = jax.lax.broadcasted_iota(jnp.int32, (1, tile), 1)
        j = o * tiles_per_split + jj
        in_bounds = (j * tile + lane) < hw           # (1, T) bool
        valid = jnp.logical_and(valid, in_bounds)
    weights = valid.astype(jnp.float32)              # (1, T)

    labels_c = jnp.clip(labels, 0, num_classes - 1)  # (1, T)

    # Numerically-stable log-sum-exp over the (small, sublane) class axis.
    col_max = jnp.max(logits, axis=0, keepdims=True)                       # (1, T)
    sum_exp = jnp.sum(jnp.exp(logits - col_max), axis=0, keepdims=True)    # (1, T)
    lse = col_max + jnp.log(sum_exp)                                       # (1, T)

    # Gather the label logit with a one-hot select on the raw logits.
    cls_ids = jax.lax.broadcasted_iota(jnp.int32, logits.shape, 0)         # (C, T)
    picked = jnp.sum(jnp.where(cls_ids == labels_c, logits, 0.0),
                     axis=0, keepdims=True)                                # (1, T)

    per_pixel = (lse - picked) * weights
    if ragged:
        # Stale/garbage lanes of a partial (or OOB) VMEM block can put Inf/NaN
        # in `lse`; Inf * 0 = NaN would poison the accumulator, so hard-zero.
        per_pixel = jnp.where(in_bounds, per_pixel, 0.0)

    # Vector (per-lane) accumulation into the resident output blocks.
    num_ref[0, 0] += per_pixel
    den_ref[0, 0] += weights


def softmax_cross_entropy_loss(logits_nchw, labels, *,
                               num_classes=21, ignore_label=255,
                               tile_hw=32768, num_splits=2):
    """logits_nchw: (N, C, H, W) float (f32 or bf16); labels: (N, H, W) int.

    Returns the scalar mean cross-entropy over non-ignored pixels (f32).
    """
    N, C, H, W = logits_nchw.shape
    assert C == num_classes
    HW = H * W

    # Free views -- no transpose, no padding; logits keep their NCHW order.
    logits3d = logits_nchw.reshape(N, C, HW)
    labels3d = labels.reshape(N, 1, HW).astype(jnp.int32)

    # Pixel-axis tile: multiple of 128 lanes; large enough to amortize the
    # ~0.35 us per-step overhead, small enough to double-buffer in VMEM.
    hw128 = pl.cdiv(HW, 128) * 128
    t = max(128, min((tile_hw // 128) * 128, hw128))
    num_tiles = pl.cdiv(HW, t)

    # Second "parallel" axis over pixel super-chunks -> megacore split on v7x
    # even when N is small (harmless serial loop on 1-TC chips).
    splits = max(1, min(num_splits, num_tiles))
    tiles_per_split = pl.cdiv(num_tiles, splits)
    need_clamp = splits * tiles_per_split != num_tiles
    ragged = need_clamp or (HW % t != 0)

    def tile_index(o, jj):
        j = o * tiles_per_split + jj
        if need_clamp:
            # OOB super-chunk tail: re-read the last valid tile (fully masked
            # off in-kernel) instead of DMA'ing past the end of the array.
            j = jnp.minimum(j, num_tiles - 1)
        return j

    kernel = functools.partial(
        _ce_kernel, num_classes=num_classes, ignore_label=ignore_label,
        hw=HW, tile=t, tiles_per_split=tiles_per_split, ragged=ragged)

    num_part, den_part = pl.pallas_call(
        kernel,
        out_shape=(jax.ShapeDtypeStruct((N, splits, 1, t), jnp.float32),
                   jax.ShapeDtypeStruct((N, splits, 1, t), jnp.float32)),
        grid_spec=pl.GridSpec(
            grid=(N, splits, tiles_per_split),
            in_specs=[
                pl.BlockSpec((1, C, t), lambda n, o, jj: (n, 0, tile_index(o, jj))),
                pl.BlockSpec((1, 1, t), lambda n, o, jj: (n, 0, tile_index(o, jj))),
            ],
            out_specs=(
                pl.BlockSpec((1, 1, 1, t), lambda n, o, jj: (n, o, 0, 0)),
                pl.BlockSpec((1, 1, 1, t), lambda n, o, jj: (n, o, 0, 0)),
            ),
        ),
        compiler_params=pltpu.CompilerParams(
            dimension_semantics=("parallel", "parallel", "arbitrary"),
            vmem_limit_bytes=32 << 20,   # plenty for t=32768 slabs, safe on v7x's 64 MiB
        ),
        cost_estimate=pl.CostEstimate(
            flops=6 * N * C * HW,
            transcendentals=N * C * HW,
            bytes_accessed=logits3d.dtype.itemsize * N * C * HW + 4 * N * HW),
    )(logits3d, labels3d)

    # Single cross-lane reduction + divide, outside the hot loop.
    # TODO(synk): den == 0 (all pixels ignored) returns NaN, matching PyTorch.
    return jnp.sum(num_part) / jnp.sum(den_part)


def _reference_loss(logits_nchw, labels, num_classes=21, ignore_label=255):
    logits2d = jnp.transpose(logits_nchw, (0, 2, 3, 1)).reshape(-1, num_classes)
    labels1d = labels.reshape(-1).astype(jnp.int32)
    w = (labels1d != ignore_label).astype(jnp.float32)
    lbl = jnp.clip(labels1d, 0, num_classes - 1)
    logp = jax.nn.log_softmax(logits2d.astype(jnp.float32), axis=-1)
    nll = -jnp.take_along_axis(logp, lbl[:, None], axis=-1)[:, 0]
    return jnp.sum(nll * w) / jnp.sum(w)


if __name__ == "__main__":
    num_classes = 21
    ignore_label = 255

    def run_case(key, N, H, W, tile_hw=32768):
        k_logits, k_labels, k_mask = jax.random.split(key, 3)
        logits = jax.random.normal(k_logits, (N, num_classes, H, W),
                                   dtype=jnp.float32)
        labels = jax.random.randint(k_labels, (N, H, W), 0, num_classes,
                                    dtype=jnp.int32)
        ignore_mask = jax.random.bernoulli(k_mask, 0.2, (N, H, W))
        labels = jnp.where(ignore_mask, ignore_label, labels)

        loss = softmax_cross_entropy_loss(
            logits, labels, num_classes=num_classes,
            ignore_label=ignore_label, tile_hw=tile_hw)
        loss = jax.block_until_ready(loss)

        ref = _reference_loss(logits, labels, num_classes, ignore_label)
        assert jnp.allclose(loss, ref, rtol=1e-5, atol=1e-5), (loss, ref)

    key = jax.random.PRNGKey(0)
    k1, k2, k3, k4 = jax.random.split(key, 4)
    run_case(k1, N=2, H=16, W=16)                # lane-exact, single tile
    run_case(k2, N=2, H=9, W=13)                 # ragged tail (HW=117 < 128)
    run_case(k3, N=1, H=20, W=40, tile_hw=256)   # multi-tile + 2-way split + ragged tail
    run_case(k4, N=2, H=24, W=32, tile_hw=256)   # odd tile count -> clamped OOB split tile
    print("KERNEL_OK")
</pallas_src>

<mosaic_0001>
module attributes {stable_mosaic.version = 11 : i64} {
  func.func @_ce_kernel(%arg0: i32, %arg1: i32, %arg2: i32, %arg3: memref<1x21x256xf32, #tpu.memory_space<vmem>>, %arg4: memref<1x1x256xi32, #tpu.memory_space<vmem>>, %arg5: memref<1x1x1x256xf32, #tpu.memory_space<vmem>>, %arg6: memref<1x1x1x256xf32, #tpu.memory_space<vmem>>) attributes {dimension_semantics = [#tpu.dimension_semantics<parallel>, #tpu.dimension_semantics<parallel>, #tpu.dimension_semantics<arbitrary>], iteration_bounds = array<i64: 2, 1, 1>, scalar_prefetch = 0 : i64, scratch_operands = 0 : i64, tpu.core_type = #tpu.core_type<tc>, window_params = [{transform_indices = @transform_0, window_bounds = array<i64: 1, 21, 256>}, {transform_indices = @transform_1, window_bounds = array<i64: 1, 1, 256>}, {transform_indices = @transform_2, window_bounds = array<i64: 1, 1, 1, 256>}, {transform_indices = @transform_3, window_bounds = array<i64: 1, 1, 1, 256>}]} {
    %c0_i32 = arith.constant 0 : i32
    %0 = arith.cmpi eq, %arg2, %c0_i32 : i32
    %1 = arith.extui %0 : i1 to i32
    %c0_i32_0 = arith.constant 0 : i32
    %2 = arith.cmpi ne, %1, %c0_i32_0 : i32
    scf.if %2 {
      %cst_26 = arith.constant 0.000000e+00 : f32
      %45 = vector.broadcast %cst_26 : f32 to vector<1x1x1x256xf32>
      %c0_27 = arith.constant 0 : index
      %c0_28 = arith.constant 0 : index
      %c0_29 = arith.constant 0 : index
      %c0_30 = arith.constant 0 : index
      %46 = vector.load %arg5[%c0_27, %c0_28, %c0_29, %c0_30] : memref<1x1x1x256xf32, #tpu.memory_space<vmem>>, vector<1x1x1x256xf32>
      tpu.vector_store %arg5[%c0_27, %c0_28, %c0_29, %c0_30], %45 {strides = array<i32>} : memref<1x1x1x256xf32, #tpu.memory_space<vmem>>, vector<1x1x1x256xf32>,
      %cst_31 = arith.constant 0.000000e+00 : f32
      %47 = vector.broadcast %cst_31 : f32 to vector<1x1x1x256xf32>
      %c0_32 = arith.constant 0 : index
      %c0_33 = arith.constant 0 : index
      %c0_34 = arith.constant 0 : index
      %c0_35 = arith.constant 0 : index
      %48 = vector.load %arg6[%c0_32, %c0_33, %c0_34, %c0_35] : memref<1x1x1x256xf32, #tpu.memory_space<vmem>>, vector<1x1x1x256xf32>
      tpu.vector_store %arg6[%c0_32, %c0_33, %c0_34, %c0_35], %47 {strides = array<i32>} : memref<1x1x1x256xf32, #tpu.memory_space<vmem>>, vector<1x1x1x256xf32>,
    } else {
    }
    %c0 = arith.constant 0 : index
    %c0_1 = arith.constant 0 : index
    %c0_2 = arith.constant 0 : index
    %3 = vector.load %arg3[%c0, %c0_1, %c0_2] : memref<1x21x256xf32, #tpu.memory_space<vmem>>, vector<1x21x256xf32>
    %4 = vector.shape_cast %3 : vector<1x21x256xf32> to vector<21x256xf32>
    %c0_3 = arith.constant 0 : index
    %c0_4 = arith.constant 0 : index
    %c0_5 = arith.constant 0 : index
    %5 = vector.load %arg4[%c0_3, %c0_4, %c0_5] : memref<1x1x256xi32, #tpu.memory_space<vmem>>, vector<1x1x256xi32>
    %6 = vector.shape_cast %5 : vector<1x1x256xi32> to vector<1x256xi32>
    %c255_i32 = arith.constant 255 : i32
    %7 = vector.broadcast %c255_i32 : i32 to vector<1x256xi32>
    %8 = arith.cmpi ne, %6, %7 : vector<1x256xi32>
    %9 = arith.extui %8 : vector<1x256xi1> to vector<1x256xi32>
    %10 = arith.sitofp %9 : vector<1x256xi32> to vector<1x256xf32>
    %c0_i32_6 = arith.constant 0 : i32
    %c20_i32 = arith.constant 20 : i32
    %11 = vector.broadcast %c0_i32_6 : i32 to vector<1x256xi32>
    %12 = arith.maxsi %11, %6 : vector<1x256xi32>
    %13 = vector.broadcast %c20_i32 : i32 to vector<1x256xi32>
    %14 = arith.minsi %13, %12 : vector<1x256xi32>
    %cst = arith.constant dense<0xFF800000> : vector<256xf32>
    %15 = vector.multi_reduction <maximumf>, %4, %cst [0] : vector<21x256xf32> to vector<256xf32>
    %16 = vector.shape_cast %15 : vector<256xf32> to vector<1x256xf32>
    %17 = vector.broadcast %16 : vector<1x256xf32> to vector<21x256xf32>
    %18 = arith.subf %4, %17 : vector<21x256xf32>
    %19 = math.exp %18 : vector<21x256xf32>
    %cst_7 = arith.constant dense<0.000000e+00> : vector<256xf32>
    %20 = vector.multi_reduction <add>, %19, %cst_7 [0] : vector<21x256xf32> to vector<256xf32>
    %21 = vector.shape_cast %20 : vector<256xf32> to vector<1x256xf32>
    %22 = math.log %21 : vector<1x256xf32>
    %23 = arith.addf %16, %22 : vector<1x256xf32>
    %24 = tpu.iota {dimensions = array<i32: 0>} : vector<21x256xi32>
    %25 = vector.broadcast %14 : vector<1x256xi32> to vector<21x256xi32>
    %26 = arith.cmpi eq, %24, %25 : vector<21x256xi32>
    %cst_8 = arith.constant 0.000000e+00 : f32
    %27 = vector.broadcast %cst_8 : f32 to vector<21x256xf32>
    %28 = arith.select %26, %4, %27 : vector<21x256xi1>, vector<21x256xf32>
    %cst_9 = arith.constant dense<0.000000e+00> : vector<256xf32>
    %29 = vector.multi_reduction <add>, %28, %cst_9 [0] : vector<21x256xf32> to vector<256xf32>
    %30 = vector.shape_cast %29 : vector<256xf32> to vector<1x256xf32>
    %31 = arith.subf %23, %30 : vector<1x256xf32>
    %32 = arith.mulf %31, %10 : vector<1x256xf32>
    %c0_10 = arith.constant 0 : index
    %c0_11 = arith.constant 0 : index
    %c0_12 = arith.constant 0 : index
    %c0_13 = arith.constant 0 : index
    %33 = vector.load %arg5[%c0_10, %c0_11, %c0_12, %c0_13] : memref<1x1x1x256xf32, #tpu.memory_space<vmem>>, vector<1x1x1x256xf32>
    %34 = vector.shape_cast %33 : vector<1x1x1x256xf32> to vector<1x256xf32>
    %35 = arith.addf %34, %32 : vector<1x256xf32>
    %c0_14 = arith.constant 0 : index
    %c0_15 = arith.constant 0 : index
    %c0_16 = arith.constant 0 : index
    %c0_17 = arith.constant 0 : index
    %36 = vector.load %arg5[%c0_14, %c0_15, %c0_16, %c0_17] : memref<1x1x1x256xf32, #tpu.memory_space<vmem>>, vector<1x1x1x256xf32>
    %37 = vector.shape_cast %36 : vector<1x1x1x256xf32> to vector<1x256xf32>
    %38 = vector.shape_cast %35 : vector<1x256xf32> to vector<1x1x1x256xf32>
    tpu.vector_store %arg5[%c0_14, %c0_15, %c0_16, %c0_17], %38 {strides = array<i32>} : memref<1x1x1x256xf32, #tpu.memory_space<vmem>>, vector<1x1x1x256xf32>,
    %c0_18 = arith.constant 0 : index
    %c0_19 = arith.constant 0 : index
    %c0_20 = arith.constant 0 : index
    %c0_21 = arith.constant 0 : index
    %39 = vector.load %arg6[%c0_18, %c0_19, %c0_20, %c0_21] : memref<1x1x1x256xf32, #tpu.memory_space<vmem>>, vector<1x1x1x256xf32>
    %40 = vector.shape_cast %39 : vector<1x1x1x256xf32> to vector<1x256xf32>
    %41 = arith.addf %40, %10 : vector<1x256xf32>
    %c0_22 = arith.constant 0 : index
    %c0_23 = arith.constant 0 : index
    %c0_24 = arith.constant 0 : index
    %c0_25 = arith.constant 0 : index
    %42 = vector.load %arg6[%c0_22, %c0_23, %c0_24, %c0_25] : memref<1x1x1x256xf32, #tpu.memory_space<vmem>>, vector<1x1x1x256xf32>
    %43 = vector.shape_cast %42 : vector<1x1x1x256xf32> to vector<1x256xf32>
    %44 = vector.shape_cast %41 : vector<1x256xf32> to vector<1x1x1x256xf32>
    tpu.vector_store %arg6[%c0_22, %c0_23, %c0_24, %c0_25], %44 {strides = array<i32>} : memref<1x1x1x256xf32, #tpu.memory_space<vmem>>, vector<1x1x1x256xf32>,
    return
  }
  func.func @transform_0(%arg0: i32, %arg1: i32, %arg2: i32) -> (i32, i32, i32) {
    %c1_i32 = arith.constant 1 : i32
    %0 = arith.muli %arg1, %c1_i32 : i32
    %1 = arith.addi %0, %arg2 : i32
    %c0_i32 = arith.constant 0 : i32
    %c0_i32_0 = arith.constant 0 : i32
    return %arg0, %c0_i32, %1 : i32, i32, i32
  }
  func.func @transform_1(%arg0: i32, %arg1: i32, %arg2: i32) -> (i32, i32, i32) {
    %c1_i32 = arith.constant 1 : i32
    %0 = arith.muli %arg1, %c1_i32 : i32
    %1 = arith.addi %0, %arg2 : i32
    %c0_i32 = arith.constant 0 : i32
    %c0_i32_0 = arith.constant 0 : i32
    return %arg0, %c0_i32, %1 : i32, i32, i32
  }
  func.func @transform_2(%arg0: i32, %arg1: i32, %arg2: i32) -> (i32, i32, i32, i32) {
    %c0_i32 = arith.constant 0 : i32
    %c0_i32_0 = arith.constant 0 : i32
    %c0_i32_1 = arith.constant 0 : i32
    return %arg0, %arg1, %c0_i32, %c0_i32_0 : i32, i32, i32, i32
  }
  func.func @transform_3(%arg0: i32, %arg1: i32, %arg2: i32) -> (i32, i32, i32, i32) {
    %c0_i32 = arith.constant 0 : i32
    %c0_i32_0 = arith.constant 0 : i32
    %c0_i32_1 = arith.constant 0 : i32
    return %arg0, %arg1, %c0_i32, %c0_i32_0 : i32, i32, i32, i32
  }
}

</mosaic_0001>

<llo_original>
// kernel: tpu_custom_call.1
$region0: #{tpu_custom_call.1}
  #allocation0 [shape = 'u32[]', space=smem, size = 0x4, offset = 0x4, fixed_abs, tag = 'smem constant byte address 0x4 - core index']
  #allocation1 [shape = 'u32[144,128]{1,0:T(1,128)}', space=vmem, size = 0x12000, scoped, tag = 'internal scratch']
  %s0 = inlined_call_operand.vmem [shape: f32[2,21,256], index: 0, kind: input, shape index: {}]
  %s1 = inlined_call_operand.vmem [shape: s32[2,1,256], index: 1, kind: input, shape index: {}]
  %s2 = inlined_call_operand.hbm [shape: f32[2,1,1,256], index: 2, kind: output, shape index: {0}]
  %s3 = inlined_call_operand.hbm [shape: f32[2,1,1,256], index: 3, kind: output, shape index: {1}]
  %4 = xla_tuple %s2, %s3
  %s5 = sld [smem:[#allocation0]]
  $region53: #{tpu_custom_call.1} parent=0
    _
  %s7 = ssub.s32 1, %s5
  %s8 = scalar_select 0, %s7, %s5
  $region1: #{tpu_custom_call.1} parent=0
    #allocation2 [shape = 'u8[2048]{0}', space=vmem, size = 0x800, scoped, tag = 'output window, operand 0']
    #allocation3 [shape = 's32[2]{0}', space=sflag, size = 0x8, scoped, tag = 'scoped memory for tpu_custom_call.1']
    #allocation4 [shape = 'u8[2048]{0}', space=vmem, size = 0x800, scoped, tag = 'output window, operand 1']
    #allocation5 [shape = 's32[2]{0}', space=sflag, size = 0x8, scoped, tag = 'scoped memory for tpu_custom_call.1']
    %9 = vsyncpa [#allocation3], 0
    %s10 = scalar_lea.sflag [#allocation3], 1
    %11 = vsyncpa %s10, 0
    %12 = vsyncpa [#allocation5], 0
    %s13 = scalar_lea.sflag [#allocation5], 1
    %14 = vsyncpa %s13, 0
    loop: start=0, step=1, limit=4
    $region2: #{tpu_custom_call.1} parent=1 // loop_pre_header
      _
    $region3: #{tpu_custom_call.1} parent=1 // loop_header
      %s16 = sphi 0, %s20
      %p17 = scmp.ge.s32.totalorder %s16, 4
      %s23 = sphi 0, %s42
      %s24 = sphi 0, %s38
      %s25 = sphi 0, %s34
      %s26 = sphi 0, %s23
      %s27 = sphi 0, %s24
      %s28 = sphi 0, %s25
      %s29 = sphi 0, %s26
      %s30 = sphi 0, %s27
      %s31 = sphi 0, %s28
      %s49 = sphi 0, %s51
      %s52 = sphi 0, %s49
      %s53 = sphi 0, %s52
      %s69 = sphi 0, %s53
      %s79 = sphi 0, %s81
      %s82 = sphi 0, %s79
      %s83 = sphi 0, %s82
      %s99 = sphi 0, %s83
      %s107 = sphi 0, %s109
      %s110 = sphi 0, %s107
      %s111 = sphi 0, %s110
      %s127 = sphi 0, %s111
      %s135 = sphi 0, %s137
      %s138 = sphi 0, %s135
      %s139 = sphi 0, %s138
      %s155 = sphi 0, %s139
    $region4: #{tpu_custom_call.1} parent=1 // loop_header_branch
      %19 = sbr.rel (%p17) target = $region8
    $region5: #{tpu_custom_call.1} parent=1 // loop_body
      %s21 = ssub.s32 %s16, 1
      %s22 = ssub.s32 %s16, 2
      %s32 = sadd.s32 1, %s25
      %p33 = scmp.ge.s32.totalorder %s32, 1
      %s34 = scalar_select %p33, 0, %s32
      %s35 = sadd.s32 1, %s24
      %s36 = scalar_select %p33, %s35, %s24
      %p37 = scmp.ge.s32.totalorder %s36, 1
      %s38 = scalar_select %p37, 0, %s36
      %s39 = sadd.s32 1, %s23
      %s40 = scalar_select %p37, %s39, %s23
      %p41 = scmp.ge.s32.totalorder %s40, 2
      %s42 = scalar_select %p41, 0, %s40
      %s43 = sadd.s32 %s24, %s25
      %s44 = sadd.s32 %s38, %s34
      %s45 = ssub.s32 %s23, %s42
      %s46 = ssub.s32 %s43, %s44
      %s47 = sor.u32 %s45, %s46
      %p48 = scmp.eq.s32.totalorder %s47, 0
      %s50 = sadd.s32 %s49, 1
      %s51 = scalar_select %p48, %s49, %s50
      %p54 = pneg %p48
      %p55 = scmp.eq.s32.totalorder %s16, 1
      %p56 = por %p54, %p55
      %p57 = scmp.ne.s32.totalorder %s49, %s52
      %p58 = scmp.eq.s32.totalorder %s16, 0
      %p59 = por %p57, %p58
      %p60 = scmp.ne.s32.totalorder %s49, %s52
      %p61 = scmp.eq.s32.totalorder %s21, 1
      %p62 = por %p60, %p61
      %p63 = scmp.ne.s32.totalorder %s52, %s53
      %p64 = scmp.eq.s32.totalorder %s21, 0
      %p65 = por %p63, %p64
      %p66 = scmp.ne.s32.totalorder %s52, %s53
      %p67 = scmp.eq.s32.totalorder %s22, 1
      %p68 = por %p66, %p67
      %p70 = scmp.ne.s32.totalorder %s53, %s69
      %p71 = scmp.eq.s32.totalorder %s22, 0
      %p72 = por %p70, %p71
      %s73 = sadd.s32 %s24, %s25
      %s74 = sadd.s32 %s38, %s34
      %s75 = ssub.s32 %s23, %s42
      %s76 = ssub.s32 %s73, %s74
      %s77 = sor.u32 %s75, %s76
      %p78 = scmp.eq.s32.totalorder %s77, 0
      %s80 = sadd.s32 %s79, 1
      %s81 = scalar_select %p78, %s79, %s80
      %p84 = pneg %p78
      %p85 = scmp.eq.s32.totalorder %s16, 1
      %p86 = por %p84, %p85
      %p87 = scmp.ne.s32.totalorder %s79, %s82
      %p88 = scmp.eq.s32.totalorder %s16, 0
      %p89 = por %p87, %p88
      %p90 = scmp.ne.s32.totalorder %s79, %s82
      %p91 = scmp.eq.s32.totalorder %s21, 1
      %p92 = por %p90, %p91
      %p93 = scmp.ne.s32.totalorder %s82, %s83
      %p94 = scmp.eq.s32.totalorder %s21, 0
      %p95 = por %p93, %p94
      %p96 = scmp.ne.s32.totalorder %s82, %s83
      %p97 = scmp.eq.s32.totalorder %s22, 1
      %p98 = por %p96, %p97
      %p100 = scmp.ne.s32.totalorder %s83, %s99
      %p101 = scmp.eq.s32.totalorder %s22, 0
      %p102 = por %p100, %p101
      %s103 = ssub.s32 %s23, %s42
      %s104 = ssub.s32 %s24, %s38
      %s105 = sor.u32 %s103, %s104
      %p106 = scmp.eq.s32.totalorder %s105, 0
      %s108 = sadd.s32 %s107, 1
      %s109 = scalar_select %p106, %s107, %s108
      %p112 = pneg %p106
      %p113 = scmp.eq.s32.totalorder %s16, 1
      %p114 = por %p112, %p113
      %p115 = scmp.ne.s32.totalorder %s107, %s110
      %p116 = scmp.eq.s32.totalorder %s16, 0
      %p117 = por %p115, %p116
      %p118 = scmp.ne.s32.totalorder %s107, %s110
      %p119 = scmp.eq.s32.totalorder %s21, 1
      %p120 = por %p118, %p119
      %p121 = scmp.ne.s32.totalorder %s110, %s111
      %p122 = scmp.eq.s32.totalorder %s21, 0
      %p123 = por %p121, %p122
      %p124 = scmp.ne.s32.totalorder %s110, %s111
      %p125 = scmp.eq.s32.totalorder %s22, 1
      %p126 = por %p124, %p125
      %p128 = scmp.ne.s32.totalorder %s111, %s127
      %p129 = scmp.eq.s32.totalorder %s22, 0
      %p130 = por %p128, %p129
      %s131 = ssub.s32 %s23, %s42
      %s132 = ssub.s32 %s24, %s38
      %s133 = sor.u32 %s131, %s132
      %p134 = scmp.eq.s32.totalorder %s133, 0
      %s136 = sadd.s32 %s135, 1
      %s137 = scalar_select %p134, %s135, %s136
      %p140 = pneg %p134
      %p141 = scmp.eq.s32.totalorder %s16, 1
      %p142 = por %p140, %p141
      %p143 = scmp.ne.s32.totalorder %s135, %s138
      %p144 = scmp.eq.s32.totalorder %s16, 0
      %p145 = por %p143, %p144
      %p146 = scmp.ne.s32.totalorder %s135, %s138
      %p147 = scmp.eq.s32.totalorder %s21, 1
      %p148 = por %p146, %p147
      %p149 = scmp.ne.s32.totalorder %s138, %s139
      %p150 = scmp.eq.s32.totalorder %s21, 0
      %p151 = por %p149, %p150
      %p152 = scmp.ne.s32.totalorder %s138, %s139
      %p153 = scmp.eq.s32.totalorder %s22, 1
      %p154 = por %p152, %p153
      %p156 = scmp.ne.s32.totalorder %s139, %s155
      %p157 = scmp.eq.s32.totalorder %s22, 0
      %p158 = por %p156, %p157
      %p159 = scmp.le.s32.totalorder 1, %s16
      %p160 = scmp.lt.s32.totalorder %s16, 3
      %p161 = pnand %p159, %p160
      %p162 = pneg %p161
      // Predicated region
      $region9: #{tpu_custom_call.1} parent=5 // pred_check
        _
      $region10: #{tpu_custom_call.1} parent=5 // pred_check_branch
        %164 = sbr.rel (%p161) target = $region12
      $region11: #{tpu_custom_call.1} parent=5 // pred_region
        %s165 = ssub.s32 %s16, 1
      $region12: #{tpu_custom_call.1} parent=5 // pred_fallthru
        _
      %p166 = scmp.lt.s32.totalorder %s16, 2
      // Predicated region
      $region13: #{tpu_custom_call.1} parent=5 // pred_check
        %p167 = pneg %p166
      $region14: #{tpu_custom_call.1} parent=5 // pred_check_branch
        %169 = sbr.rel (%p167) target = $region16
      $region15: #{tpu_custom_call.1} parent=5 // pred_region
        // Predicated region
        $region17: #{tpu_custom_call.1} parent=15 // pred_check
          %p170 = pneg %p59
        $region18: #{tpu_custom_call.1} parent=15 // pred_check_branch
          %172 = sbr.rel (%p170) target = $region20
        $region19: #{tpu_custom_call.1} parent=15 // pred_region
          %s173 = sadd.s32 %s24, %s25
          %s174 = smul.u32 2, %s173
          %p175 = scmp.lt.s32.totalorder %s23, 1
          %s176 = scalar_select %p175, %s23, 1
          %p177 = scmp.lt.s32.totalorder %s174, 1
          %s178 = scalar_select %p177, %s174, 1
          %s179 = smul.addr %s176, 6
          %s180 = sadd.s32 %s178, %s179
          %s181 = smul.addr %s180, 8
          %s182 = scalar_lea.vmem %s0, %s181
          %s183 = sadd.s32 %s24, %s25
          %s184 = smul.u32 2, %s183
        $region20: #{tpu_custom_call.1} parent=15 // pred_fallthru
          _
        // Predicated region
        $region21: #{tpu_custom_call.1} parent=15 // pred_check
          %p185 = pneg %p89
        $region22: #{tpu_custom_call.1} parent=15 // pred_check_branch
          %187 = sbr.rel (%p185) target = $region24
        $region23: #{tpu_custom_call.1} parent=15 // pred_region
          %s188 = sadd.s32 %s24, %s25
          %s189 = smul.u32 2, %s188
          %p190 = scmp.lt.s32.totalorder %s23, 1
          %s191 = scalar_select %p190, %s23, 1
          %p192 = scmp.lt.s32.totalorder %s189, 1
          %s193 = scalar_select %p192, %s189, 1
          %s194 = smul.addr %s191, 2
          %s195 = sadd.s32 %s193, %s194
          %s196 = scalar_lea.vmem %s1, %s195
          %s197 = sadd.s32 %s24, %s25
          %s198 = smul.u32 2, %s197
        $region24: #{tpu_custom_call.1} parent=15 // pred_fallthru
          _
      $region16: #{tpu_custom_call.1} parent=5 // pred_fallthru
        _
      %p199 = scmp.le.s32.totalorder 1, %s16
      %p200 = scmp.lt.s32.totalorder %s16, 3
      %p201 = pnand %p199, %p200
      %p202 = pneg %p201
      // Predicated region
      $region25: #{tpu_custom_call.1} parent=5 // pred_check
        _
      $region26: #{tpu_custom_call.1} parent=5 // pred_check_branch
        %204 = sbr.rel (%p201) target = $region28
      $region27: #{tpu_custom_call.1} parent=5 // pred_region
        %s205 = ssub.s32 %s16, 1
        %s206 = sadd.s32 %s27, %s28
        %s207 = smul.u32 2, %s206
        %p208 = scmp.lt.s32.totalorder %s26, 1
        %s209 = scalar_select %p208, %s26, 1
        %p210 = scmp.lt.s32.totalorder %s207, 1
        %s211 = scalar_select %p210, %s207, 1
        %s212 = smul.addr %s209, 6
        %s213 = sadd.s32 %s211, %s212
        %s214 = smul.addr %s213, 8
        %s215 = scalar_lea.vmem %s0, %s214
        %p216 = pneg %p65
        %p217 = pneg %p62
        %s218 = sadd.s32 %s27, %s28
        %s219 = smul.u32 2, %s218
        %p220 = scmp.lt.s32.totalorder %s26, 1
        %s221 = scalar_select %p220, %s26, 1
        %p222 = scmp.lt.s32.totalorder %s219, 1
        %s223 = scalar_select %p222, %s219, 1
        %s224 = smul.addr %s221, 2
        %s225 = sadd.s32 %s223, %s224
        %s226 = scalar_lea.vmem %s1, %s225
        %p227 = pneg %p95
        %p228 = pneg %p92
        %p229 = pneg %p123
        %p230 = pneg %p120
        %s231 = sand.u32 %s110, 1
        %s232 = scalar_lea.sflag [#allocation3], %s231
        %s233 = sand.u32 %s110, 1
        %s234 = smul.addr %s233, 2
        %s235 = scalar_lea.vmem [#allocation2], %s234
        %p236 = pneg %p151
        %p237 = pneg %p148
        %s238 = sand.u32 %s138, 1
        %s239 = scalar_lea.sflag [#allocation5], %s238
        %s240 = sand.u32 %s138, 1
        %s241 = smul.addr %s240, 2
        %s242 = scalar_lea.vmem [#allocation4], %s241
        %s243 = sadd.s32 %s27, %s28
        %s244 = smul.u32 2, %s243
        %p245 = scmp.lt.s32.totalorder %s26, 1
        %s246 = scalar_select %p245, %s26, 1
        %p247 = scmp.lt.s32.totalorder %s244, 1
        %s248 = scalar_select %p247, %s244, 1
        %s249 = smul.addr %s246, 6
        %s250 = sadd.s32 %s248, %s249
        %s251 = smul.addr %s250, 8
        %s252 = scalar_lea.vmem %s0, %s251
        %s253 = sadd.s32 %s27, %s28
        %s254 = smul.u32 2, %s253
        %s255 = sadd.s32 %s27, %s28
        %s256 = smul.u32 2, %s255
        %p257 = scmp.lt.s32.totalorder %s26, 1
        %s258 = scalar_select %p257, %s26, 1
        %p259 = scmp.lt.s32.totalorder %s256, 1
        %s260 = scalar_select %p259, %s256, 1
        %s261 = smul.addr %s258, 2
        %s262 = sadd.s32 %s260, %s261
        %s263 = scalar_lea.vmem %s1, %s262
        %s264 = sadd.s32 %s27, %s28
        %s265 = smul.u32 2, %s264
        %p266 = scmp.eq.s32.totalorder %s28, 0
        // Predicated region
        $region29: #{tpu_custom_call.1} parent=27 // pred_check
          %p267 = pneg %p266
        $region30: #{tpu_custom_call.1} parent=27 // pred_check_branch
          %269 = sbr.rel (%p267) target = $region32
        $region31: #{tpu_custom_call.1} parent=27 // pred_region
          %v270 = vlaneseq
          %vm271 = vcmp.ge.s32.totalorder %v270, 0
          %vm272 = vcmp.lt.s32.totalorder %v270, 256
          %vm273 = vmand %vm271, %vm272
          %274 = vst.msk [vmem:[%s235] sm:$0x3] %vm273, 0.0
          %275 = vst.msk [vmem:[%s242] sm:$0x3] %vm273, 0.0
        $region32: #{tpu_custom_call.1} parent=27 // pred_fallthru
          _
        %v276 = vld [vmem:[%s252] sm:$0xff]
        %v277 = vld [vmem:[%s252 + $0x8] sm:$0xff]
        %v278 = vld [vmem:[%s252 + $0x10] sm:$0xff]
        %v279 = vld [vmem:[%s252 + $0x18] sm:$0xff]
        %v280 = vld [vmem:[%s252 + $0x20] sm:$0x1f]
        %v281 = vld [vmem:[%s252 + $0x28] sm:$0x1f]
        %v282 = vld [vmem:[%s263] sm:$0x3]
        %vm283 = vcmp.ne.s32.totalorder %v282, 255
        %v284 = vsel %vm283, 1, 0
        %v285 = vcvt.s32.f32 %v284
        %vm286 = vcmp.gt.s32.totalorder %v282, 0
        %v287 = vsel %vm286, %v282, 0
        %vm288 = vcmp.lt.s32.totalorder %v287, 20
        %v289 = vsel %vm288, %v287, 20
        %vm290 = vcmask 1044480
        %v291 = vsel %vm290, %v280, -inf
        %v292 = vmax.f32 %v276, %v291
        %v293 = vmax.f32 %v292, %v278
        %v294 = vrot.slane %v293, 4
        %v295 = vmax.f32 %v293, %v294
        %v296 = vrot.slane %v295, 2
        %v297 = vmax.f32 %v295, %v296
        %v298 = vrot.slane %v297, 1
        %v299 = vmax.f32 %v297, %v298
        %v300 = vsel %vm290, %v281, -inf
        %v301 = vmax.f32 %v277, %v300
        %v302 = vmax.f32 %v301, %v279
        %v303 = vrot.slane %v302, 4
        %v304 = vmax.f32 %v302, %v303
        %v305 = vrot.slane %v304, 2
        %v306 = vmax.f32 %v304, %v305
        %v307 = vrot.slane %v306, 1
        %v308 = vmax.f32 %v306, %v307
        %v309 = vsub.f32 %v276, %v299
        %v310 = vsub.f32 %v277, %v308
        %v311 = vsub.f32 %v278, %v299
        %v312 = vsub.f32 %v279, %v308
        %v313 = vsub.f32 %v280, %v299
        %v314 = vsub.f32 %v281, %v308
        %v315 = vmul.f32 %v309, 1.442695
        %v316 = vpow.pop %v315
        %v317 = vmul.f32 %v310, 1.442695
        %v318 = vpow.pop %v317
        %v319 = vmul.f32 %v311, 1.442695
        %v320 = vpow.pop %v319
        %v321 = vmul.f32 %v312, 1.442695
        %v322 = vpow.pop %v321
        %v323 = vmul.f32 %v313, 1.442695
        %v324 = vpow.pop %v323
        %v325 = vmul.f32 %v314, 1.442695
        %v326 = vpow.pop %v325
        %v327 = vadd.f32 %v316, %v320
        %v328 = vsel %vm290, %v324, 0.0
        %v329 = vadd.f32 %v327, %v328
        %v330 = vrot.slane %v329, 4
        %v331 = vadd.f32 %v329, %v330
        %v332 = vrot.slane %v331, 2
        %v333 = vadd.f32 %v331, %v332
        %v334 = vrot.slane %v333, 1
        %v335 = vadd.f32 %v333, %v334
        %v336 = vadd.f32 %v318, %v322
        %v337 = vsel %vm290, %v326, 0.0
        %v338 = vadd.f32 %v336, %v337
        %v339 = vrot.slane %v338, 4
        %v340 = vadd.f32 %v338, %v339
        %v341 = vrot.slane %v340, 2
        %v342 = vadd.f32 %v340, %v341
        %v343 = vrot.slane %v342, 1
        %v344 = vadd.f32 %v342, %v343
        %v345 = vlog2.pop %v335
        %v346 = vmul.f32 %v345, 0.6931472
        %v347 = vlog2.pop %v344
        %v348 = vmul.f32 %v347, 0.6931472
        %v349 = vadd.f32 %v299, %v346
        %v350 = vadd.f32 %v308, %v348
        %v351 = vlaneseq
        %v352 = vshrl.u32 %v351, 7
        %v353 = vadd.s32 %v352, 8
        %v354 = vadd.s32 %v352, 16
        %v355 = vlaneseq
        %v356 = vshrl.u32 %v355, 7
        %v357 = vsub.s32 0, %v356
        %v358 = vrot.slane %v289, %v357
        %v359 = vlaneseq
        %v360 = vshrl.u32 %v359, 7
        %v361 = vsub.s32 1, %v360
        %v362 = vrot.slane %v289, %v361
        %vm363 = vcmp.eq.s32.totalorder %v352, %v358
        %vm364 = vcmp.eq.s32.totalorder %v352, %v362
        %vm365 = vcmp.eq.s32.totalorder %v353, %v358
        %vm366 = vcmp.eq.s32.totalorder %v353, %v362
        %vm367 = vcmp.eq.s32.totalorder %v354, %v358
        %vm368 = vcmp.eq.s32.totalorder %v354, %v362
        %v369 = vsel %vm363, %v276, 0.0
        %v370 = vsel %vm364, %v277, 0.0
        %v371 = vsel %vm365, %v278, 0.0
        %v372 = vsel %vm366, %v279, 0.0
        %v373 = vsel %vm367, %v280, 0.0
        %v374 = vsel %vm368, %v281, 0.0
        %v375 = vadd.f32 %v369, %v371
        %v376 = vsel %vm290, %v373, 0.0
        %v377 = vadd.f32 %v375, %v376
        %v378 = vrot.slane %v377, 4
        %v379 = vadd.f32 %v377, %v378
        %v380 = vrot.slane %v379, 2
        %v381 = vadd.f32 %v379, %v380
        %v382 = vrot.slane %v381, 1
        %v383 = vadd.f32 %v381, %v382
        %v384 = vadd.f32 %v370, %v372
        %v385 = vsel %vm290, %v374, 0.0
        %v386 = vadd.f32 %v384, %v385
        %v387 = vrot.slane %v386, 4
        %v388 = vadd.f32 %v386, %v387
        %v389 = vrot.slane %v388, 2
        %v390 = vadd.f32 %v388, %v389
        %v391 = vrot.slane %v390, 1
        %v392 = vadd.f32 %v390, %v391
        %v393 = vsub.f32 %v349, %v383
        %v394 = vsub.f32 %v350, %v392
        %v396 = vlaneseq
        %v397 = vshrl.u32 %v396, 7
        %v398 = vsub.s32 0, %v397
        %v399 = vrot.slane %v285, %v398
        %v400 = vlaneseq
        %v401 = vshrl.u32 %v400, 7
        %v402 = vsub.s32 1, %v401
        %v403 = vrot.slane %v285, %v402
        %v406 = vmul.f32 %v393, %v399
        %v407 = vmul.f32 %v394, %v403
        %v408 = vld [vmem:[%s235] sm:$0x3]
        %v411 = vcombine.low %v406, %v407
        %v413 = vunpack.c.l.s4 1966171168
        %v414 = vunpack.c.0.s8 %v413
        %v415 = vlaneseq
        %v416 = vshrl.u32 %v415, 7
        %v417 = vsub.s32 %v414, %v416
        %v418 = vrot.slane %v411, %v417
        %v420 = vunpack.c.l.s4 1966171168
        %v421 = vunpack.c.0.s8 %v420
        %v422 = vlaneseq
        %v423 = vshrl.u32 %v422, 7
        %v424 = vsub.s32 %v421, %v423
        %v425 = vrot.slane %v418, %v424
        %v427 = vadd.f32 %v408, %v425
        %v428 = vlaneseq
        %vm429 = vcmp.ge.s32.totalorder %v428, 0
        %vm430 = vcmp.lt.s32.totalorder %v428, 256
        %vm431 = vmand %vm429, %vm430
        %432 = vst.msk [vmem:[%s235] sm:$0x3] %vm431, %v427
        %v433 = vld [vmem:[%s242] sm:$0x3]
        %v434 = vadd.f32 %v433, %v285
        %435 = vst.msk [vmem:[%s242] sm:$0x3] %vm431, %v434
        %s436 = sand.u32 %s110, 1
        %s437 = scalar_lea.sflag [#allocation3], %s436
        %s438 = sand.u32 %s110, 1
        %s439 = smul.addr %s438, 2
        %s440 = scalar_lea.vmem [#allocation2], %s439
        %s441 = sand.u32 %s138, 1
        %s442 = scalar_lea.sflag [#allocation5], %s441
        %s443 = sand.u32 %s138, 1
        %s444 = smul.addr %s443, 2
        %s445 = scalar_lea.vmem [#allocation4], %s444
        // Predicated region
        $region33: #{tpu_custom_call.1} parent=27 // pred_check
          %p446 = pneg %p120
        $region34: #{tpu_custom_call.1} parent=27 // pred_check_branch
          %448 = sbr.rel (%p446) target = $region36
        $region35: #{tpu_custom_call.1} parent=27 // pred_region
          %s450 = ssub.s32 32, 32
          %451 = vsyncadd %s437, %s450
          %s452 = smul.addr %s27, 2
          %s453 = smul.addr %s26, 2
          %s454 = sadd.s32 %s452, %s453
          %s455 = smul.addr %s454, 16
          %s456 = scalar_lea.hbm %s2, %s455
          %s458 = sshll.u32 %s440, 4
          %s459 = int_to_ptr.vmem [resolvable:$true] %s458
          %461 = dma.vmem_to_hbm [thread:$0]  %s459, 32, %s456, %s437
        $region36: #{tpu_custom_call.1} parent=27 // pred_fallthru
          _
        // Predicated region
        $region37: #{tpu_custom_call.1} parent=27 // pred_check
          %p462 = pneg %p148
        $region38: #{tpu_custom_call.1} parent=27 // pred_check_branch
          %464 = sbr.rel (%p462) target = $region40
        $region39: #{tpu_custom_call.1} parent=27 // pred_region
          %s466 = ssub.s32 32, 32
          %467 = vsyncadd %s442, %s466
          %s468 = smul.addr %s27, 2
          %s469 = smul.addr %s26, 2
          %s470 = sadd.s32 %s468, %s469
          %s471 = smul.addr %s470, 16
          %s472 = scalar_lea.hbm %s3, %s471
          %s474 = sshll.u32 %s445, 4
          %s475 = int_to_ptr.vmem [resolvable:$true] %s474
          %477 = dma.vmem_to_hbm [thread:$0]  %s475, 32, %s472, %s442
        $region40: #{tpu_custom_call.1} parent=27 // pred_fallthru
          _
      $region28: #{tpu_custom_call.1} parent=5 // pred_fallthru
        _
      %p478 = scmp.le.s32.totalorder 2, %s16
      // Predicated region
      $region41: #{tpu_custom_call.1} parent=5 // pred_check
        %p479 = pneg %p478
      $region42: #{tpu_custom_call.1} parent=5 // pred_check_branch
        %481 = sbr.rel (%p479) target = $region44
      $region43: #{tpu_custom_call.1} parent=5 // pred_region
        %s482 = ssub.s32 %s16, 2
        // Predicated region
        $region45: #{tpu_custom_call.1} parent=43 // pred_check
          %p483 = pneg %p126
        $region46: #{tpu_custom_call.1} parent=43 // pred_check_branch
          %485 = sbr.rel (%p483) target = $region48
        $region47: #{tpu_custom_call.1} parent=43 // pred_region
          %s486 = sand.u32 %s111, 1
          %s487 = scalar_lea.sflag [#allocation3], %s486
          %s488 = sand.u32 %s111, 1
          %s489 = smul.addr %s488, 2
          %s490 = scalar_lea.vmem [#allocation2], %s489
          %491 = dma.done %s487, 32
        $region48: #{tpu_custom_call.1} parent=43 // pred_fallthru
          _
        // Predicated region
        $region49: #{tpu_custom_call.1} parent=43 // pred_check
          %p492 = pneg %p154
        $region50: #{tpu_custom_call.1} parent=43 // pred_check_branch
          %494 = sbr.rel (%p492) target = $region52
        $region51: #{tpu_custom_call.1} parent=43 // pred_region
          %s495 = sand.u32 %s139, 1
          %s496 = scalar_lea.sflag [#allocation5], %s495
          %s497 = sand.u32 %s139, 1
          %s498 = smul.addr %s497, 2
          %s499 = scalar_lea.vmem [#allocation4], %s498
          %500 = dma.done %s496, 32
        $region52: #{tpu_custom_call.1} parent=43 // pred_fallthru
          _
      $region44: #{tpu_custom_call.1} parent=5 // pred_fallthru
        _
    $region6: #{tpu_custom_call.1} parent=1 // loop_footer
      %s20 = sadd.s32 1, %s16
    $region7: #{tpu_custom_call.1} parent=1 // loop_footer_branch
      %15 = sbr.rel target = $region3
    $region8: #{tpu_custom_call.1} parent=1 // loop_exit
      _
    %501 = vsyncpa [#allocation3], 1
    %s502 = scalar_lea.sflag [#allocation3], 1
    %503 = vsyncpa %s502, 1
    %504 = vsyncpa [#allocation5], 1
    %s505 = scalar_lea.sflag [#allocation5], 1
    %506 = vsyncpa %s505, 1

</llo_original>
